<compile_context>
chip_gen: v5e
topology: v5e:2x2
jax: 0.10.0
libtpu: 0.0.40
codegen_flags: <defaults>
</compile_context>

<pallas_src>
import jax
import jax.numpy as jnp
import numpy as np
from jax.experimental import pallas as pl
from jax.experimental.pallas import tpu as pltpu

CHUNK = 150  # hardcoded chunk width in the PyTorch module


def _round_up(n, m):
    return (n + m - 1) // m * m


def _mlp_fused_kernel(x_ref, w_ref, b_ref, o_ref):
    # One MXU matmul per batch tile; f32 accumulation + f32 bias add, cast at store.
    acc = jnp.dot(x_ref[...], w_ref[...], preferred_element_type=jnp.float32)
    o_ref[...] = (acc + b_ref[...]).astype(o_ref.dtype)


def mlp_rsna1_forward(x, w_full, b_full, *, block_b=2048):
    """x: (B, F); w_full: (F, num_classes); b_full: (1, num_classes) f32.

    Returns (B, num_classes) float32 — exactly the PyTorch module's output.
    """
    B, F = x.shape
    Fw, N = w_full.shape
    assert Fw == F, (Fw, F)

    if B <= block_b:
        # Single step; block dims equal the full array dims -> no (8,128) issue,
        # no padding, no post-kernel slice.
        tb = B
        steps = 1
    else:
        steps = pl.cdiv(B, block_b)
        # v7x has 2 TensorCores: an even step count keeps them balanced
        # (no-op on single-core v5e/v6e).
        if steps % 2:
            steps += 1
        tb = _round_up(pl.cdiv(B, steps), 8)   # sublane-aligned tile
        steps = pl.cdiv(B, tb)                 # ragged last block handled by Pallas

    itemsize_x = jnp.dtype(x.dtype).itemsize
    itemsize_w = jnp.dtype(w_full.dtype).itemsize
    cost = pl.CostEstimate(
        flops=2 * B * F * N,
        transcendentals=0,
        bytes_accessed=B * F * itemsize_x + F * N * itemsize_w + N * 4 + B * N * 4,
    )

    return pl.pallas_call(
        _mlp_fused_kernel,
        out_shape=jax.ShapeDtypeStruct((B, N), jnp.float32),
        grid=(steps,),
        in_specs=[
            pl.BlockSpec((tb, F), lambda i: (i, 0)),   # batch-tiled, pipelined
            pl.BlockSpec((F, N), lambda i: (0, 0)),    # weights resident in VMEM
            pl.BlockSpec((1, N), lambda i: (0, 0)),    # bias resident in VMEM
        ],
        out_specs=pl.BlockSpec((tb, N), lambda i: (i, 0)),  # narrow (num_classes) writeback
        compiler_params=pltpu.CompilerParams(dimension_semantics=("parallel",)),
        cost_estimate=cost,
    )(x, w_full, b_full)


def init_chunk_params(key, num_chunks, num_classes):
    """Per-chunk Linear(150, num_classes) params, matching nn.Linear default init range."""
    Ws, bs = [], []
    bound = 1.0 / np.sqrt(CHUNK)
    for _ in range(num_chunks):
        key, kw, kb = jax.random.split(key, 3)
        Ws.append(jax.random.uniform(kw, (num_classes, CHUNK), jnp.float32, -bound, bound))
        bs.append(jax.random.uniform(kb, (num_classes,), jnp.float32, -bound, bound))
    return Ws, bs


def build_fused_params(Ws, bs, input_num, num_classes, weight_dtype=jnp.float32):
    """Pack per-chunk Linears (+ the mean over chunks) into one (F, num_classes) weight."""
    num_chunks = len(Ws)
    W = jnp.zeros((input_num, num_classes), jnp.float32)
    for i, Wi in enumerate(Ws):
        W = W.at[i * CHUNK:(i + 1) * CHUNK, :].set(Wi.T / num_chunks)
    b = jnp.mean(jnp.stack(bs, axis=0), axis=0).reshape(1, num_classes)
    # Bias stays f32 (added to the f32 accumulator); only matmul operands may be narrow.
    return W.astype(weight_dtype), b.astype(jnp.float32)


def reference_forward(x, Ws, bs):
    """Plain-JAX emulation of the PyTorch forward (sanity check)."""
    outs = []
    for i, (Wi, bi) in enumerate(zip(Ws, bs)):
        chunk = x[:, i * CHUNK:(i + 1) * CHUNK]
        outs.append(chunk @ Wi.T + bi)
    return jnp.stack(outs, axis=1).mean(axis=1)


if __name__ == "__main__":
    # Small config consistent with the module: input_num = 2 * 150, num_classes = 6.
    num_classes = 6
    input_num = 2 * CHUNK
    batch = 4

    key = jax.random.PRNGKey(0)
    key, kx = jax.random.split(key)
    x = jax.random.normal(kx, (batch, input_num), jnp.float32)

    key, kp = jax.random.split(key)
    Ws, bs = init_chunk_params(kp, input_num // CHUNK, num_classes)

    # --- f32 path, tiny batch (single grid step, block == full array dims) ---
    w_full, b_full = build_fused_params(Ws, bs, input_num, num_classes)
    out = jax.block_until_ready(mlp_rsna1_forward(x, w_full, b_full))
    assert out.shape == (batch, num_classes)
    ref = reference_forward(x, Ws, bs)
    np.testing.assert_allclose(np.asarray(out), np.asarray(ref), rtol=2e-4, atol=2e-4)

    # --- larger ragged batch, bf16 *storage* for x and W (multi-step even grid,
    #     ragged last block, no padding, no wrapper-side cast at call time) ---
    key, kx2 = jax.random.split(key)
    x_big = jax.random.normal(kx2, (1064, input_num), jnp.float32).astype(jnp.bfloat16)
    w_bf16, b_full2 = build_fused_params(Ws, bs, input_num, num_classes,
                                         weight_dtype=jnp.bfloat16)
    out_big = jax.block_until_ready(
        mlp_rsna1_forward(x_big, w_bf16, b_full2, block_b=512))
    assert out_big.shape == (1064, num_classes)
    ref_big = reference_forward(x_big.astype(jnp.float32), Ws, bs)
    np.testing.assert_allclose(np.asarray(out_big), np.asarray(ref_big),
                               rtol=5e-2, atol=5e-2)

    print("KERNEL_OK")
</pallas_src>

<mosaic_0001>
module attributes {stable_mosaic.version = 11 : i64} {
  func.func @_mlp_fused_kernel(%arg0: i32, %arg1: memref<4x300xf32, #tpu.memory_space<vmem>>, %arg2: memref<300x6xf32, #tpu.memory_space<vmem>>, %arg3: memref<1x6xf32, #tpu.memory_space<vmem>>, %arg4: memref<4x6xf32, #tpu.memory_space<vmem>>) attributes {dimension_semantics = [#tpu.dimension_semantics<parallel>], iteration_bounds = array<i64: 1>, scalar_prefetch = 0 : i64, scratch_operands = 0 : i64, tpu.core_type = #tpu.core_type<tc>, window_params = [{transform_indices = @transform_0, window_bounds = array<i64: 4, 300>}, {pipeline_mode = #tpu.pipeline_mode<synchronous>, transform_indices = @transform_1, window_bounds = array<i64: 300, 6>}, {pipeline_mode = #tpu.pipeline_mode<synchronous>, transform_indices = @transform_2, window_bounds = array<i64: 1, 6>}, {transform_indices = @transform_3, window_bounds = array<i64: 4, 6>}]} {
    %c0 = arith.constant 0 : index
    %c0_0 = arith.constant 0 : index
    %0 = vector.load %arg1[%c0, %c0_0] : memref<4x300xf32, #tpu.memory_space<vmem>>, vector<4x300xf32>
    %c0_1 = arith.constant 0 : index
    %c0_2 = arith.constant 0 : index
    %1 = vector.load %arg2[%c0_1, %c0_2] : memref<300x6xf32, #tpu.memory_space<vmem>>, vector<300x6xf32>
    %cst = arith.constant dense<0.000000e+00> : vector<4x6xf32>
    %2 = tpu.matmul %0, %1, %cst {dimension_numbers = #tpu.dot_dimension_numbers<[1], [0], [0], [1], [0, 0, 1, 1], [], []>} : vector<4x300xf32>, vector<300x6xf32>, vector<4x6xf32> -> vector<4x6xf32>
    %c0_3 = arith.constant 0 : index
    %c0_4 = arith.constant 0 : index
    %3 = vector.load %arg3[%c0_3, %c0_4] : memref<1x6xf32, #tpu.memory_space<vmem>>, vector<1x6xf32>
    %4 = vector.broadcast %3 : vector<1x6xf32> to vector<4x6xf32>
    %5 = arith.addf %2, %4 : vector<4x6xf32>
    %c0_5 = arith.constant 0 : index
    %c0_6 = arith.constant 0 : index
    %6 = vector.load %arg4[%c0_5, %c0_6] : memref<4x6xf32, #tpu.memory_space<vmem>>, vector<4x6xf32>
    tpu.vector_store %arg4[%c0_5, %c0_6], %5 {strides = array<i32>} : memref<4x6xf32, #tpu.memory_space<vmem>>, vector<4x6xf32>,
    return
  }
  func.func @transform_0(%arg0: i32) -> (i32, i32) {
    %c0_i32 = arith.constant 0 : i32
    %c0_i32_0 = arith.constant 0 : i32
    return %arg0, %c0_i32 : i32, i32
  }
  func.func @transform_1(%arg0: i32) -> (i32, i32) {
    %c0_i32 = arith.constant 0 : i32
    %c0_i32_0 = arith.constant 0 : i32
    %c0_i32_1 = arith.constant 0 : i32
    return %c0_i32, %c0_i32_0 : i32, i32
  }
  func.func @transform_2(%arg0: i32) -> (i32, i32) {
    %c0_i32 = arith.constant 0 : i32
    %c0_i32_0 = arith.constant 0 : i32
    %c0_i32_1 = arith.constant 0 : i32
    return %c0_i32, %c0_i32_0 : i32, i32
  }
  func.func @transform_3(%arg0: i32) -> (i32, i32) {
    %c0_i32 = arith.constant 0 : i32
    %c0_i32_0 = arith.constant 0 : i32
    return %arg0, %c0_i32 : i32, i32
  }
}

</mosaic_0001>

<llo_original>
// kernel: tpu_custom_call.1
$region0: #{tpu_custom_call.1}
  #allocation0 [shape = 'u32[]', space=smem, size = 0x4, offset = 0x4, fixed_abs, tag = 'smem constant byte address 0x4 - core index']
  #allocation1 [shape = 'u32[72,128]{1,0:T(1,128)}', space=vmem, size = 0x9000, scoped, tag = 'internal scratch']
  %s0 = inlined_call_operand.vmem [shape: f32[4,300], index: 0, kind: input, shape index: {}]
  %s1 = inlined_call_operand.vmem [shape: f32[300,6], index: 1, kind: input, shape index: {}]
  %s2 = inlined_call_operand.vmem [shape: f32[1,6], index: 2, kind: input, shape index: {}]
  %s3 = inlined_call_operand.hbm [shape: f32[4,6], index: 3, kind: output, shape index: {}]
  %s4 = sld [smem:[#allocation0]]
  $region22: #{tpu_custom_call.1} parent=0
    _
  %s6 = ssub.s32 1, %s4
  %s7 = scalar_select 0, %s6, %s4
  $region1: #{tpu_custom_call.1} parent=0
    #allocation2 [shape = 'u8[2048]{0}', space=vmem, size = 0x800, scoped, tag = 'output window, operand 0, single buffered']
    #allocation3 [shape = 's32[1]{0}', space=sflag, size = 0x4, scoped, tag = 'scoped memory for tpu_custom_call.1']
    %8 = vsyncpa [#allocation3], 0
    // Predicated region
    $region2: #{tpu_custom_call.1} parent=1 // pred_check
      _
    $region3: #{tpu_custom_call.1} parent=1 // pred_check_branch
      %10 = sbr.rel (0) target = $region5
    $region4: #{tpu_custom_call.1} parent=1 // pred_region
      _
    $region5: #{tpu_custom_call.1} parent=1 // pred_fallthru
      _
    // Predicated region
    $region6: #{tpu_custom_call.1} parent=1 // pred_check
      _
    $region7: #{tpu_custom_call.1} parent=1 // pred_check_branch
      %12 = sbr.rel (0) target = $region9
    $region8: #{tpu_custom_call.1} parent=1 // pred_region
      _
    $region9: #{tpu_custom_call.1} parent=1 // pred_fallthru
      _
    // Predicated region
    $region10: #{tpu_custom_call.1} parent=1 // pred_check
      _
    $region11: #{tpu_custom_call.1} parent=1 // pred_check_branch
      %14 = sbr.rel (0) target = $region13
    $region12: #{tpu_custom_call.1} parent=1 // pred_region
      _
    $region13: #{tpu_custom_call.1} parent=1 // pred_fallthru
      _
    %v15 = vld [vmem:[%s0] sm:$0xff]
    %v16 = vld [vmem:[%s0 + $0x8] sm:$0xf]
    %v17 = vld [vmem:[%s1] sm:$0xff]
    %v18 = vld [vmem:[%s1 + $0x8] sm:$0xff]
    %v19 = vld [vmem:[%s1 + $0x10] sm:$0xff]
    %v20 = vld [vmem:[%s1 + $0x18] sm:$0xff]
    %v21 = vld [vmem:[%s1 + $0x20] sm:$0xff]
    %v22 = vld [vmem:[%s1 + $0x28] sm:$0xff]
    %v23 = vld [vmem:[%s1 + $0x30] sm:$0xff]
    %v24 = vld [vmem:[%s1 + $0x38] sm:$0xff]
    %v25 = vld [vmem:[%s1 + $0x40] sm:$0xff]
    %v26 = vld [vmem:[%s1 + $0x48] sm:$0xff]
    %v27 = vld [vmem:[%s1 + $0x50] sm:$0xff]
    %v28 = vld [vmem:[%s1 + $0x58] sm:$0xff]
    %v29 = vld [vmem:[%s1 + $0x60] sm:$0xff]
    %v30 = vld [vmem:[%s1 + $0x68] sm:$0xff]
    %v31 = vld [vmem:[%s1 + $0x70] sm:$0xff]
    %v32 = vld [vmem:[%s1 + $0x78] sm:$0xff]
    %v33 = vld [vmem:[%s1 + $0x80] sm:$0xff]
    %v34 = vld [vmem:[%s1 + $0x88] sm:$0xff]
    %v35 = vld [vmem:[%s1 + $0x90] sm:$0xff]
    %v36 = vld [vmem:[%s1 + $0x98] sm:$0xff]
    %v37 = vld [vmem:[%s1 + $0xa0] sm:$0xff]
    %v38 = vld [vmem:[%s1 + $0xa8] sm:$0xff]
    %v39 = vld [vmem:[%s1 + $0xb0] sm:$0xff]
    %v40 = vld [vmem:[%s1 + $0xb8] sm:$0xff]
    %v41 = vld [vmem:[%s1 + $0xc0] sm:$0xff]
    %v42 = vld [vmem:[%s1 + $0xc8] sm:$0xff]
    %v43 = vld [vmem:[%s1 + $0xd0] sm:$0xff]
    %v44 = vld [vmem:[%s1 + $0xd8] sm:$0xff]
    %v45 = vld [vmem:[%s1 + $0xe0] sm:$0xff]
    %v46 = vld [vmem:[%s1 + $0xe8] sm:$0xff]
    %v47 = vld [vmem:[%s1 + $0xf0] sm:$0xff]
    %v48 = vld [vmem:[%s1 + $0xf8] sm:$0xff]
    %v49 = vld [vmem:[%s1 + $0x100] sm:$0xff]
    %v50 = vld [vmem:[%s1 + $0x108] sm:$0xff]
    %v51 = vld [vmem:[%s1 + $0x110] sm:$0xff]
    %v52 = vld [vmem:[%s1 + $0x118] sm:$0xff]
    %v53 = vld [vmem:[%s1 + $0x120] sm:$0xff]
    %v54 = vld [vmem:[%s1 + $0x128] sm:$0xf]
    %v55 = vld [vmem:[%s2] sm:$0x1]
    %v57 = vperm.slane %v55, 0
    %61 = vst [vmem:[#allocation1] ss:$2 sm:$0xff] %v15
    %s62 = scalar_lea.vmem [#allocation1], 16
    %63 = vst [vmem:[%s62] ss:$2 sm:$0xff] %v16
    %v64 = vld.sshfl [vmem:[#allocation1] sm:$0xff pattern:$0x75316420]
    %v65 = vld.sshfl [vmem:[#allocation1 + $0x8] sm:$0xff pattern:$0x75316420]
    %v66 = vld.sshfl [vmem:[#allocation1 + $0x10] sm:$0xff pattern:$0x75316420]
    %vm69 = vcmask 359424
    %v70 = vsel %vm69, %v66, 0
    %vm72 = vcmask 1043456
    %v74 = vsel %vm72, %v54, 0
    %76 = vmatpush.msra.mxu0 %v32
    %77 = vmatpush.msra.mxu0 %v31
    %78 = vmatpush.msra.mxu0 %v30
    %79 = vmatpush.msra.mxu0 %v29
    %80 = vmatpush.msra.mxu0 %v28
    %81 = vmatpush.msra.mxu0 %v27
    %82 = vmatpush.msra.mxu0 %v26
    %83 = vmatpush.msra.mxu0 %v25
    %84 = vmatpush.msra.mxu0 %v24
    %85 = vmatpush.msra.mxu0 %v23
    %86 = vmatpush.msra.mxu0 %v22
    %87 = vmatpush.msra.mxu0 %v21
    %88 = vmatpush.msra.mxu0 %v20
    %89 = vmatpush.msra.mxu0 %v19
    %90 = vmatpush.msra.mxu0 %v18
    %91 = vmatpush.msra.mxu0 %v17
    %92 = vmatmul.f32.gmra.mxu0 %v64
    %v93 = vpop.f32.mrf.mxu0
    %v94 = vadd.f32 %v57, %v93
    %95 = vdwg.mxu0
    %96 = vmatpush.msra.mxu0 %v48
    %97 = vmatpush.msra.mxu0 %v47
    %98 = vmatpush.msra.mxu0 %v46
    %99 = vmatpush.msra.mxu0 %v45
    %100 = vmatpush.msra.mxu0 %v44
    %101 = vmatpush.msra.mxu0 %v43
    %102 = vmatpush.msra.mxu0 %v42
    %103 = vmatpush.msra.mxu0 %v41
    %104 = vmatpush.msra.mxu0 %v40
    %105 = vmatpush.msra.mxu0 %v39
    %106 = vmatpush.msra.mxu0 %v38
    %107 = vmatpush.msra.mxu0 %v37
    %108 = vmatpush.msra.mxu0 %v36
    %109 = vmatpush.msra.mxu0 %v35
    %110 = vmatpush.msra.mxu0 %v34
    %111 = vmatpush.msra.mxu0 %v33
    %112 = vmatmul.f32.gmra.mxu0 %v65
    %v113 = vpop.f32.mrf.mxu0
    %v114 = vadd.f32 %v94, %v113
    %115 = vdwg.mxu0
    %116 = vmatpush.msra.mxu0 0.0
    %117 = vmatpush.msra.mxu0 0.0
    %118 = vmatpush.msra.mxu0 0.0
    %119 = vmatpush.msra.mxu0 0.0
    %120 = vmatpush.msra.mxu0 0.0
    %121 = vmatpush.msra.mxu0 0.0
    %122 = vmatpush.msra.mxu0 0.0
    %123 = vmatpush.msra.mxu0 0.0
    %124 = vmatpush.msra.mxu0 0.0
    %125 = vmatpush.msra.mxu0 0.0
    %126 = vmatpush.msra.mxu0 %v74
    %127 = vmatpush.msra.mxu0 %v53
    %128 = vmatpush.msra.mxu0 %v52
    %129 = vmatpush.msra.mxu0 %v51
    %130 = vmatpush.msra.mxu0 %v50
    %131 = vmatpush.msra.mxu0 %v49
    %132 = vmatmul.f32.gmra.mxu0 %v70
    %v133 = vpop.f32.mrf.mxu0
    %v134 = vadd.f32 %v114, %v133
    %135 = vdwg.mxu0
    %vm136 = vcmask 44032
    %137 = vst.msk [vmem:[#allocation2] sm:$0xf] %vm136, %v134
    // Predicated region
    $region14: #{tpu_custom_call.1} parent=1 // pred_check
      _
    $region15: #{tpu_custom_call.1} parent=1 // pred_check_branch
      %139 = sbr.rel (0) target = $region17
    $region16: #{tpu_custom_call.1} parent=1 // pred_region
      %141 = vsyncadd [#allocation3], 0
      %s143 = sshll.u32 [#allocation2], 4
      %s144 = int_to_ptr.vmem [resolvable:$true] %s143
      %s145 = sshll.u32 %s3, 4
      %s146 = int_to_ptr.hbm [resolvable:$true] %s145
      %148 = dma.vmem_to_hbm [thread:$0]  %s144, 64, %s146, [#allocation3]
    $region17: #{tpu_custom_call.1} parent=1 // pred_fallthru
      _
    // Predicated region
    $region18: #{tpu_custom_call.1} parent=1 // pred_check
      _
    $region19: #{tpu_custom_call.1} parent=1 // pred_check_branch
      %150 = sbr.rel (0) target = $region21
    $region20: #{tpu_custom_call.1} parent=1 // pred_region
      %152 = dma.done [#allocation3], 64
    $region21: #{tpu_custom_call.1} parent=1 // pred_fallthru
      _
    %153 = vsyncpa [#allocation3], 1

</llo_original>
